<compile_context>
chip_gen: v5e
topology: v5e:2x2
jax: 0.10.0
libtpu: 0.0.40
codegen_flags: <defaults>
</compile_context>

<pallas_src>
import math
from functools import partial

import jax
import jax.numpy as jnp
from jax.experimental import pallas as pl
from jax.experimental.pallas import tpu as pltpu

LANE = 128     # lane (last-dim) tile width
SUBLANE = 8    # sublane (second-to-last dim) tile width


def _round_up(x, m):
    return ((x + m - 1) // m) * m


def _fused_mlp_kernel_factory(n_layers, mxu_dtype):
    """Kernel computing the full Linear/ReLU chain on 128-lane-padded operands.

    Ref order: x, w0, b0, w1, b1, ..., w_{L-1}, b_{L-1}, out.
    Intermediates never leave the core; only the final activation is stored.
    """

    def kernel(*refs):
        x_ref = refs[0]
        o_ref = refs[-1]
        h = x_ref[...]                                  # (TM, D0_pad) f32
        for layer in range(n_layers):
            w_ref = refs[1 + 2 * layer]
            b_ref = refs[2 + 2 * layer]
            lhs = h if mxu_dtype is None else h.astype(mxu_dtype)
            rhs = w_ref[...]
            if mxu_dtype is not None:
                rhs = rhs.astype(mxu_dtype)
            y = jnp.dot(lhs, rhs, preferred_element_type=jnp.float32)
            y = y + b_ref[...]                          # bias + ReLU in f32 (VPU)
            if layer < n_layers - 1:
                y = jnp.maximum(y, 0.0)
            h = y
        o_ref[...] = h.astype(o_ref.dtype)

    return kernel


@partial(jax.jit, static_argnames=("mxu_dtype",))
def fused_mlp(x, params, *, mxu_dtype=None):
    """Run the whole MLP as a single Pallas call.

    x:      (M, D0) float32
    params: list of (w, b) with w: (D_in, D_out) (already transposed from
            PyTorch's (out, in) layout), b: (D_out,)
    """
    M, D0 = x.shape
    n_layers = len(params)

    # Lane-pad every feature dim to a multiple of 128 -> unmasked vst, full vregs.
    dims = [D0] + [w.shape[1] for (w, _) in params]
    dims_pad = [_round_up(d, LANE) for d in dims]

    # Sublane-pad the batch; tile it across the grid so v7x can shard over 2 TCs.
    M_pad = _round_up(M, SUBLANE)
    TM = 256 if M_pad >= 256 else M_pad
    M_pad = _round_up(M_pad, TM)
    grid_m = M_pad // TM

    # Zero-padding is exact: padded input columns hit zero weight rows, padded
    # output lanes get bias 0 (and are sliced away at the end).
    x_p = jnp.zeros((M_pad, dims_pad[0]), x.dtype).at[:M, :D0].set(x)

    padded_operands = []
    for li, (w, b) in enumerate(params):
        k, n = w.shape
        kp, np_ = dims_pad[li], dims_pad[li + 1]
        w_p = jnp.zeros((kp, np_), w.dtype).at[:k, :n].set(w)
        b_p = jnp.zeros((1, np_), b.dtype).at[0, :n].set(b)
        padded_operands += [w_p, b_p]

    in_specs = [pl.BlockSpec((TM, dims_pad[0]), lambda i: (i, 0))]
    for li in range(n_layers):
        kp, np_ = dims_pad[li], dims_pad[li + 1]
        in_specs.append(pl.BlockSpec((kp, np_), lambda i: (0, 0)))   # weight resident
        in_specs.append(pl.BlockSpec((1, np_), lambda i: (0, 0)))    # bias row resident
    out_spec = pl.BlockSpec((TM, dims_pad[-1]), lambda i: (i, 0))

    kernel = _fused_mlp_kernel_factory(n_layers, mxu_dtype)

    out_p = pl.pallas_call(
        kernel,
        out_shape=jax.ShapeDtypeStruct((M_pad, dims_pad[-1]), x.dtype),
        grid=(grid_m,),
        in_specs=in_specs,
        out_specs=out_spec,
        compiler_params=pltpu.CompilerParams(
            dimension_semantics=("parallel",),   # shard batch tiles across TCs on v7x
        ),
    )(x_p, *padded_operands)

    # TODO(synk): for hidden sizes in the thousands, add a K-reduction grid axis
    # with an f32 accumulator and size blocks against v7x's 64 MiB VMEM.
    return out_p[:M, :dims[-1]]


def init_params(units_per_layer, key):
    """Deterministic init matching torch.nn.Linear's default:
    weight, bias ~ U(-1/sqrt(fan_in), 1/sqrt(fan_in)).
    Weights are stored as (in_features, out_features)."""
    params = []
    for layer_i in range(len(units_per_layer) - 1):
        fan_in = units_per_layer[layer_i]
        fan_out = units_per_layer[layer_i + 1]
        bound = 1.0 / math.sqrt(fan_in)
        key, kw, kb = jax.random.split(key, 3)
        w = jax.random.uniform(
            kw, (fan_in, fan_out), jnp.float32, minval=-bound, maxval=bound
        )
        b = jax.random.uniform(
            kb, (fan_out,), jnp.float32, minval=-bound, maxval=bound
        )
        params.append((w, b))
    return params


def torch_model_forward(features, params):
    """Equivalent of TorchModel.forward: Linear layers with ReLU between all
    but the last layer, fused into one Pallas kernel."""
    return fused_mlp(features, params)


if __name__ == "__main__":
    # Small shapes consistent with the module: an MLP over [batch, features].
    units_per_layer = [32, 64, 48, 16]
    batch = 8

    key = jax.random.PRNGKey(0)
    key, kx = jax.random.split(key)
    features = jax.random.normal(kx, (batch, units_per_layer[0]), jnp.float32)

    params = init_params(units_per_layer, key)

    out = torch_model_forward(features, params)
    out = jax.block_until_ready(out)

    assert out.shape == (batch, units_per_layer[-1]), out.shape
    assert out.dtype == jnp.float32

    # Cross-check against plain-JAX reference of the same math.
    ref = features
    for i, (w, b) in enumerate(params):
        ref = ref @ w + b
        if i < len(params) - 1:
            ref = jnp.maximum(ref, 0.0)
    assert jnp.allclose(out, ref, atol=1e-5, rtol=1e-5)

    print("KERNEL_OK")
</pallas_src>

<mosaic_0001>
module attributes {stable_mosaic.version = 11 : i64} {
  func.func @kernel(%arg0: i32, %arg1: memref<8x128xf32, #tpu.memory_space<vmem>>, %arg2: memref<128x128xf32, #tpu.memory_space<vmem>>, %arg3: memref<1x128xf32, #tpu.memory_space<vmem>>, %arg4: memref<128x128xf32, #tpu.memory_space<vmem>>, %arg5: memref<1x128xf32, #tpu.memory_space<vmem>>, %arg6: memref<128x128xf32, #tpu.memory_space<vmem>>, %arg7: memref<1x128xf32, #tpu.memory_space<vmem>>, %arg8: memref<8x128xf32, #tpu.memory_space<vmem>>) attributes {dimension_semantics = [#tpu.dimension_semantics<parallel>], iteration_bounds = array<i64: 1>, scalar_prefetch = 0 : i64, scratch_operands = 0 : i64, tpu.core_type = #tpu.core_type<tc>, window_params = [{transform_indices = @transform_0, window_bounds = array<i64: 8, 128>}, {pipeline_mode = #tpu.pipeline_mode<synchronous>, transform_indices = @transform_1, window_bounds = array<i64: 128, 128>}, {pipeline_mode = #tpu.pipeline_mode<synchronous>, transform_indices = @transform_2, window_bounds = array<i64: 1, 128>}, {pipeline_mode = #tpu.pipeline_mode<synchronous>, transform_indices = @transform_3, window_bounds = array<i64: 128, 128>}, {pipeline_mode = #tpu.pipeline_mode<synchronous>, transform_indices = @transform_4, window_bounds = array<i64: 1, 128>}, {pipeline_mode = #tpu.pipeline_mode<synchronous>, transform_indices = @transform_5, window_bounds = array<i64: 128, 128>}, {pipeline_mode = #tpu.pipeline_mode<synchronous>, transform_indices = @transform_6, window_bounds = array<i64: 1, 128>}, {transform_indices = @transform_7, window_bounds = array<i64: 8, 128>}]} {
    %c0 = arith.constant 0 : index
    %c0_0 = arith.constant 0 : index
    %0 = vector.load %arg1[%c0, %c0_0] : memref<8x128xf32, #tpu.memory_space<vmem>>, vector<8x128xf32>
    %c0_1 = arith.constant 0 : index
    %c0_2 = arith.constant 0 : index
    %1 = vector.load %arg2[%c0_1, %c0_2] : memref<128x128xf32, #tpu.memory_space<vmem>>, vector<128x128xf32>
    %cst = arith.constant dense<0.000000e+00> : vector<8x128xf32>
    %2 = tpu.matmul %0, %1, %cst {dimension_numbers = #tpu.dot_dimension_numbers<[1], [0], [0], [1], [0, 0, 1, 1], [], []>} : vector<8x128xf32>, vector<128x128xf32>, vector<8x128xf32> -> vector<8x128xf32>
    %c0_3 = arith.constant 0 : index
    %c0_4 = arith.constant 0 : index
    %3 = vector.load %arg3[%c0_3, %c0_4] : memref<1x128xf32, #tpu.memory_space<vmem>>, vector<1x128xf32>
    %4 = vector.broadcast %3 : vector<1x128xf32> to vector<8x128xf32>
    %5 = arith.addf %2, %4 : vector<8x128xf32>
    %cst_5 = arith.constant 0.000000e+00 : f32
    %6 = vector.broadcast %cst_5 : f32 to vector<8x128xf32>
    %7 = arith.maximumf %5, %6 : vector<8x128xf32>
    %c0_6 = arith.constant 0 : index
    %c0_7 = arith.constant 0 : index
    %8 = vector.load %arg4[%c0_6, %c0_7] : memref<128x128xf32, #tpu.memory_space<vmem>>, vector<128x128xf32>
    %cst_8 = arith.constant dense<0.000000e+00> : vector<8x128xf32>
    %9 = tpu.matmul %7, %8, %cst_8 {dimension_numbers = #tpu.dot_dimension_numbers<[1], [0], [0], [1], [0, 0, 1, 1], [], []>} : vector<8x128xf32>, vector<128x128xf32>, vector<8x128xf32> -> vector<8x128xf32>
    %c0_9 = arith.constant 0 : index
    %c0_10 = arith.constant 0 : index
    %10 = vector.load %arg5[%c0_9, %c0_10] : memref<1x128xf32, #tpu.memory_space<vmem>>, vector<1x128xf32>
    %11 = vector.broadcast %10 : vector<1x128xf32> to vector<8x128xf32>
    %12 = arith.addf %9, %11 : vector<8x128xf32>
    %cst_11 = arith.constant 0.000000e+00 : f32
    %13 = vector.broadcast %cst_11 : f32 to vector<8x128xf32>
    %14 = arith.maximumf %12, %13 : vector<8x128xf32>
    %c0_12 = arith.constant 0 : index
    %c0_13 = arith.constant 0 : index
    %15 = vector.load %arg6[%c0_12, %c0_13] : memref<128x128xf32, #tpu.memory_space<vmem>>, vector<128x128xf32>
    %cst_14 = arith.constant dense<0.000000e+00> : vector<8x128xf32>
    %16 = tpu.matmul %14, %15, %cst_14 {dimension_numbers = #tpu.dot_dimension_numbers<[1], [0], [0], [1], [0, 0, 1, 1], [], []>} : vector<8x128xf32>, vector<128x128xf32>, vector<8x128xf32> -> vector<8x128xf32>
    %c0_15 = arith.constant 0 : index
    %c0_16 = arith.constant 0 : index
    %17 = vector.load %arg7[%c0_15, %c0_16] : memref<1x128xf32, #tpu.memory_space<vmem>>, vector<1x128xf32>
    %18 = vector.broadcast %17 : vector<1x128xf32> to vector<8x128xf32>
    %19 = arith.addf %16, %18 : vector<8x128xf32>
    %c0_17 = arith.constant 0 : index
    %c0_18 = arith.constant 0 : index
    %20 = vector.load %arg8[%c0_17, %c0_18] : memref<8x128xf32, #tpu.memory_space<vmem>>, vector<8x128xf32>
    tpu.vector_store %arg8[%c0_17, %c0_18], %19 {strides = array<i32>} : memref<8x128xf32, #tpu.memory_space<vmem>>, vector<8x128xf32>,
    return
  }
  func.func @transform_0(%arg0: i32) -> (i32, i32) {
    %c0_i32 = arith.constant 0 : i32
    %c0_i32_0 = arith.constant 0 : i32
    return %arg0, %c0_i32 : i32, i32
  }
  func.func @transform_1(%arg0: i32) -> (i32, i32) {
    %c0_i32 = arith.constant 0 : i32
    %c0_i32_0 = arith.constant 0 : i32
    %c0_i32_1 = arith.constant 0 : i32
    return %c0_i32, %c0_i32_0 : i32, i32
  }
  func.func @transform_2(%arg0: i32) -> (i32, i32) {
    %c0_i32 = arith.constant 0 : i32
    %c0_i32_0 = arith.constant 0 : i32
    %c0_i32_1 = arith.constant 0 : i32
    return %c0_i32, %c0_i32_0 : i32, i32
  }
  func.func @transform_3(%arg0: i32) -> (i32, i32) {
    %c0_i32 = arith.constant 0 : i32
    %c0_i32_0 = arith.constant 0 : i32
    %c0_i32_1 = arith.constant 0 : i32
    return %c0_i32, %c0_i32_0 : i32, i32
  }
  func.func @transform_4(%arg0: i32) -> (i32, i32) {
    %c0_i32 = arith.constant 0 : i32
    %c0_i32_0 = arith.constant 0 : i32
    %c0_i32_1 = arith.constant 0 : i32
    return %c0_i32, %c0_i32_0 : i32, i32
  }
  func.func @transform_5(%arg0: i32) -> (i32, i32) {
    %c0_i32 = arith.constant 0 : i32
    %c0_i32_0 = arith.constant 0 : i32
    %c0_i32_1 = arith.constant 0 : i32
    return %c0_i32, %c0_i32_0 : i32, i32
  }
  func.func @transform_6(%arg0: i32) -> (i32, i32) {
    %c0_i32 = arith.constant 0 : i32
    %c0_i32_0 = arith.constant 0 : i32
    %c0_i32_1 = arith.constant 0 : i32
    return %c0_i32, %c0_i32_0 : i32, i32
  }
  func.func @transform_7(%arg0: i32) -> (i32, i32) {
    %c0_i32 = arith.constant 0 : i32
    %c0_i32_0 = arith.constant 0 : i32
    return %arg0, %c0_i32 : i32, i32
  }
}

</mosaic_0001>

<llo_original>
// kernel: fused_mlp.1
$region0: #{fused_mlp.1}
  #allocation0 [shape = 'u32[]', space=smem, size = 0x4, offset = 0x4, fixed_abs, tag = 'smem constant byte address 0x4 - core index']
  #allocation1 [shape = 'u32[72,128]{1,0:T(1,128)}', space=vmem, size = 0x9000, scoped, tag = 'internal scratch']
  %s0 = inlined_call_operand.vmem [shape: f32[8,128], index: 0, kind: input, shape index: {}]
  %s1 = inlined_call_operand.vmem [shape: f32[128,128], index: 1, kind: input, shape index: {}]
  %s2 = inlined_call_operand.vmem [shape: f32[1,128], index: 2, kind: input, shape index: {}]
  %s3 = inlined_call_operand.vmem [shape: f32[128,128], index: 3, kind: input, shape index: {}]
  %s4 = inlined_call_operand.vmem [shape: f32[1,128], index: 4, kind: input, shape index: {}]
  %s5 = inlined_call_operand.vmem [shape: f32[128,128], index: 5, kind: input, shape index: {}]
  %s6 = inlined_call_operand.vmem [shape: f32[1,128], index: 6, kind: input, shape index: {}]
  %s7 = inlined_call_operand.hbm [shape: f32[8,128], index: 7, kind: output, shape index: {}]
  %s8 = sld [smem:[#allocation0]]
  $region38: #{fused_mlp.1} parent=0
    _
  %s10 = ssub.s32 1, %s8
  %s11 = scalar_select 0, %s10, %s8
  $region1: #{fused_mlp.1} parent=0
    #allocation2 [shape = 'u8[4096]{0}', space=vmem, size = 0x1000, scoped, tag = 'output window, operand 0, single buffered']
    #allocation3 [shape = 's32[1]{0}', space=sflag, size = 0x4, scoped, tag = 'scoped memory for fused_mlp.1']
    %12 = vsyncpa [#allocation3], 0
    // Predicated region
    $region2: #{fused_mlp.1} parent=1 // pred_check
      _
    $region3: #{fused_mlp.1} parent=1 // pred_check_branch
      %14 = sbr.rel (0) target = $region5
    $region4: #{fused_mlp.1} parent=1 // pred_region
      _
    $region5: #{fused_mlp.1} parent=1 // pred_fallthru
      _
    // Predicated region
    $region6: #{fused_mlp.1} parent=1 // pred_check
      _
    $region7: #{fused_mlp.1} parent=1 // pred_check_branch
      %16 = sbr.rel (0) target = $region9
    $region8: #{fused_mlp.1} parent=1 // pred_region
      _
    $region9: #{fused_mlp.1} parent=1 // pred_fallthru
      _
    // Predicated region
    $region10: #{fused_mlp.1} parent=1 // pred_check
      _
    $region11: #{fused_mlp.1} parent=1 // pred_check_branch
      %18 = sbr.rel (0) target = $region13
    $region12: #{fused_mlp.1} parent=1 // pred_region
      _
    $region13: #{fused_mlp.1} parent=1 // pred_fallthru
      _
    // Predicated region
    $region14: #{fused_mlp.1} parent=1 // pred_check
      _
    $region15: #{fused_mlp.1} parent=1 // pred_check_branch
      %20 = sbr.rel (0) target = $region17
    $region16: #{fused_mlp.1} parent=1 // pred_region
      _
    $region17: #{fused_mlp.1} parent=1 // pred_fallthru
      _
    // Predicated region
    $region18: #{fused_mlp.1} parent=1 // pred_check
      _
    $region19: #{fused_mlp.1} parent=1 // pred_check_branch
      %22 = sbr.rel (0) target = $region21
    $region20: #{fused_mlp.1} parent=1 // pred_region
      _
    $region21: #{fused_mlp.1} parent=1 // pred_fallthru
      _
    // Predicated region
    $region22: #{fused_mlp.1} parent=1 // pred_check
      _
    $region23: #{fused_mlp.1} parent=1 // pred_check_branch
      %24 = sbr.rel (0) target = $region25
    $region24: #{fused_mlp.1} parent=1 // pred_region
      _
    $region25: #{fused_mlp.1} parent=1 // pred_fallthru
      _
    // Predicated region
    $region26: #{fused_mlp.1} parent=1 // pred_check
      _
    $region27: #{fused_mlp.1} parent=1 // pred_check_branch
      %26 = sbr.rel (0) target = $region29
    $region28: #{fused_mlp.1} parent=1 // pred_region
      _
    $region29: #{fused_mlp.1} parent=1 // pred_fallthru
      _
    %v27 = vld [vmem:[%s0] sm:$0xff]
    %v28 = vld [vmem:[%s1] sm:$0xff]
    %v29 = vld [vmem:[%s1 + $0x8] sm:$0xff]
    %v30 = vld [vmem:[%s1 + $0x10] sm:$0xff]
    %v31 = vld [vmem:[%s1 + $0x18] sm:$0xff]
    %v32 = vld [vmem:[%s1 + $0x20] sm:$0xff]
    %v33 = vld [vmem:[%s1 + $0x28] sm:$0xff]
    %v34 = vld [vmem:[%s1 + $0x30] sm:$0xff]
    %v35 = vld [vmem:[%s1 + $0x38] sm:$0xff]
    %v36 = vld [vmem:[%s1 + $0x40] sm:$0xff]
    %v37 = vld [vmem:[%s1 + $0x48] sm:$0xff]
    %v38 = vld [vmem:[%s1 + $0x50] sm:$0xff]
    %v39 = vld [vmem:[%s1 + $0x58] sm:$0xff]
    %v40 = vld [vmem:[%s1 + $0x60] sm:$0xff]
    %v41 = vld [vmem:[%s1 + $0x68] sm:$0xff]
    %v42 = vld [vmem:[%s1 + $0x70] sm:$0xff]
    %v43 = vld [vmem:[%s1 + $0x78] sm:$0xff]
    %v44 = vld [vmem:[%s2] sm:$0x1]
    %v46 = vperm.slane %v44, 0
    %48 = vmatpush.msra.mxu0 %v43
    %49 = vmatpush.msra.mxu0 %v42
    %50 = vmatpush.msra.mxu0 %v41
    %51 = vmatpush.msra.mxu0 %v40
    %52 = vmatpush.msra.mxu0 %v39
    %53 = vmatpush.msra.mxu0 %v38
    %54 = vmatpush.msra.mxu0 %v37
    %55 = vmatpush.msra.mxu0 %v36
    %56 = vmatpush.msra.mxu0 %v35
    %57 = vmatpush.msra.mxu0 %v34
    %58 = vmatpush.msra.mxu0 %v33
    %59 = vmatpush.msra.mxu0 %v32
    %60 = vmatpush.msra.mxu0 %v31
    %61 = vmatpush.msra.mxu0 %v30
    %62 = vmatpush.msra.mxu0 %v29
    %63 = vmatpush.msra.mxu0 %v28
    %64 = vmatmul.f32.gmra.mxu0 %v27
    %v65 = vpop.f32.mrf.mxu0
    %v66 = vadd.f32 %v46, %v65
    %67 = vdwg.mxu0
    %v68 = vmax.f32 %v66, 0.0
    %v69 = vld [vmem:[%s3] sm:$0xff]
    %v70 = vld [vmem:[%s3 + $0x8] sm:$0xff]
    %v71 = vld [vmem:[%s3 + $0x10] sm:$0xff]
    %v72 = vld [vmem:[%s3 + $0x18] sm:$0xff]
    %v73 = vld [vmem:[%s3 + $0x20] sm:$0xff]
    %v74 = vld [vmem:[%s3 + $0x28] sm:$0xff]
    %v75 = vld [vmem:[%s3 + $0x30] sm:$0xff]
    %v76 = vld [vmem:[%s3 + $0x38] sm:$0xff]
    %v77 = vld [vmem:[%s3 + $0x40] sm:$0xff]
    %v78 = vld [vmem:[%s3 + $0x48] sm:$0xff]
    %v79 = vld [vmem:[%s3 + $0x50] sm:$0xff]
    %v80 = vld [vmem:[%s3 + $0x58] sm:$0xff]
    %v81 = vld [vmem:[%s3 + $0x60] sm:$0xff]
    %v82 = vld [vmem:[%s3 + $0x68] sm:$0xff]
    %v83 = vld [vmem:[%s3 + $0x70] sm:$0xff]
    %v84 = vld [vmem:[%s3 + $0x78] sm:$0xff]
    %v85 = vld [vmem:[%s4] sm:$0x1]
    %v87 = vperm.slane %v85, 0
    %89 = vmatpush.msra.mxu0 %v84
    %90 = vmatpush.msra.mxu0 %v83
    %91 = vmatpush.msra.mxu0 %v82
    %92 = vmatpush.msra.mxu0 %v81
    %93 = vmatpush.msra.mxu0 %v80
    %94 = vmatpush.msra.mxu0 %v79
    %95 = vmatpush.msra.mxu0 %v78
    %96 = vmatpush.msra.mxu0 %v77
    %97 = vmatpush.msra.mxu0 %v76
    %98 = vmatpush.msra.mxu0 %v75
    %99 = vmatpush.msra.mxu0 %v74
    %100 = vmatpush.msra.mxu0 %v73
    %101 = vmatpush.msra.mxu0 %v72
    %102 = vmatpush.msra.mxu0 %v71
    %103 = vmatpush.msra.mxu0 %v70
    %104 = vmatpush.msra.mxu0 %v69
    %105 = vmatmul.f32.gmra.mxu0 %v68
    %v106 = vpop.f32.mrf.mxu0
    %v107 = vadd.f32 %v87, %v106
    %108 = vdwg.mxu0
    %v109 = vmax.f32 %v107, 0.0
    %v110 = vld [vmem:[%s5] sm:$0xff]
    %v111 = vld [vmem:[%s5 + $0x8] sm:$0xff]
    %v112 = vld [vmem:[%s5 + $0x10] sm:$0xff]
    %v113 = vld [vmem:[%s5 + $0x18] sm:$0xff]
    %v114 = vld [vmem:[%s5 + $0x20] sm:$0xff]
    %v115 = vld [vmem:[%s5 + $0x28] sm:$0xff]
    %v116 = vld [vmem:[%s5 + $0x30] sm:$0xff]
    %v117 = vld [vmem:[%s5 + $0x38] sm:$0xff]
    %v118 = vld [vmem:[%s5 + $0x40] sm:$0xff]
    %v119 = vld [vmem:[%s5 + $0x48] sm:$0xff]
    %v120 = vld [vmem:[%s5 + $0x50] sm:$0xff]
    %v121 = vld [vmem:[%s5 + $0x58] sm:$0xff]
    %v122 = vld [vmem:[%s5 + $0x60] sm:$0xff]
    %v123 = vld [vmem:[%s5 + $0x68] sm:$0xff]
    %v124 = vld [vmem:[%s5 + $0x70] sm:$0xff]
    %v125 = vld [vmem:[%s5 + $0x78] sm:$0xff]
    %v126 = vld [vmem:[%s6] sm:$0x1]
    %v128 = vperm.slane %v126, 0
    %130 = vmatpush.msra.mxu0 %v125
    %131 = vmatpush.msra.mxu0 %v124
    %132 = vmatpush.msra.mxu0 %v123
    %133 = vmatpush.msra.mxu0 %v122
    %134 = vmatpush.msra.mxu0 %v121
    %135 = vmatpush.msra.mxu0 %v120
    %136 = vmatpush.msra.mxu0 %v119
    %137 = vmatpush.msra.mxu0 %v118
    %138 = vmatpush.msra.mxu0 %v117
    %139 = vmatpush.msra.mxu0 %v116
    %140 = vmatpush.msra.mxu0 %v115
    %141 = vmatpush.msra.mxu0 %v114
    %142 = vmatpush.msra.mxu0 %v113
    %143 = vmatpush.msra.mxu0 %v112
    %144 = vmatpush.msra.mxu0 %v111
    %145 = vmatpush.msra.mxu0 %v110
    %146 = vmatmul.f32.gmra.mxu0 %v109
    %v147 = vpop.f32.mrf.mxu0
    %v148 = vadd.f32 %v128, %v147
    %149 = vdwg.mxu0
    %150 = vst [vmem:[#allocation2] sm:$0xff] %v148
    // Predicated region
    $region30: #{fused_mlp.1} parent=1 // pred_check
      _
    $region31: #{fused_mlp.1} parent=1 // pred_check_branch
      %152 = sbr.rel (0) target = $region33
    $region32: #{fused_mlp.1} parent=1 // pred_region
      %154 = vsyncadd [#allocation3], 0
      %s156 = sshll.u32 [#allocation2], 4
      %s157 = int_to_ptr.vmem [resolvable:$true] %s156
      %s158 = sshll.u32 %s7, 4
      %s159 = int_to_ptr.hbm [resolvable:$true] %s158
      %161 = dma.vmem_to_hbm [thread:$0]  %s157, 128, %s159, [#allocation3]
    $region33: #{fused_mlp.1} parent=1 // pred_fallthru
      _
    // Predicated region
    $region34: #{fused_mlp.1} parent=1 // pred_check
      _
    $region35: #{fused_mlp.1} parent=1 // pred_check_branch
      %163 = sbr.rel (0) target = $region37
    $region36: #{fused_mlp.1} parent=1 // pred_region
      %165 = dma.done [#allocation3], 128
    $region37: #{fused_mlp.1} parent=1 // pred_fallthru
      _
    %166 = vsyncpa [#allocation3], 1

</llo_original>
